<compile_context>
chip_gen: v7x
topology: tpu7x:2x2x1
jax: 0.10.0
libtpu: 0.0.40
codegen_flags: <defaults>
</compile_context>

<pallas_src>
import jax
import jax.numpy as jnp
from jax import lax
from jax.experimental import pallas as pl
from jax.experimental.pallas import tpu as pltpu


def dwsep_conv1d_kernel(x_ref, wdw_ref, wpw_ref, bias_ref, o_ref):
    """One batch tile per grid step; batch*padded-length folded onto the lane axis.

    x_ref   : (C_in,  Wb)   padded input block, Wb = Bt * Lp, Lp = L + 2P
    wdw_ref : (C_in,  K)    depthwise weights (resident)
    wpw_ref : (C_out, C_in) pointwise weights (resident, dense -- no kron / zeros)
    bias_ref: (C_out, 1)    combined bias  W_pw @ b_dw + b_pw  (resident)
    o_ref   : (C_out, Wb)   output block in the folded/padded layout; columns
                            b*Lp + t (t in [0, L_out)) hold batch b's result, the
                            remaining columns are junk the wrapper slices away.
    """
    Wb = x_ref.shape[1]
    K = wdw_ref.shape[1]
    Wv = Wb - K + 1   # "valid"-conv width over the folded, per-sequence-padded axis

    # Depthwise conv: K static lane-shifted window loads, f32 FMA accumulation on the VPU.
    acc = x_ref[:, 0:Wv].astype(jnp.float32) * wdw_ref[:, 0:1]
    for k in range(1, K):                       # K is small & static -> fully unrolled
        acc = acc + x_ref[:, k:k + Wv].astype(jnp.float32) * wdw_ref[:, k:k + 1]

    # Pointwise (1x1) conv: one dense MXU matmul, contraction dim = C_in (no wasted MACs),
    # lane dim = Wv (batch x padded length -> lane-dense).  Bias added in the epilogue.
    out = jnp.dot(wpw_ref[...], acc, preferred_element_type=jnp.float32) + bias_ref[...]
    o_ref[:, 0:Wv] = out.astype(o_ref.dtype)


def _choose_batch_tile(B, Lp, C_in, C_out, itemsize):
    """Batch elements folded into one grid step (lane-axis block width = Bt*Lp).

    Picks the largest divisor of B whose double-buffered in+out blocks fit the per-step
    VMEM budget, subject to the lane-tiling rule (Bt*Lp % 128 == 0 unless Bt == B).
    Never forces a multi-step split for small problems (on single-TC parts extra grid
    steps are pure per-step overhead).
    """
    bytes_per_batch = 2 * (C_in + C_out) * Lp * itemsize   # 2x: double-buffered in + out
    try:
        budget = min(pltpu.get_tpu_info().vmem_capacity_bytes // 8, 16 << 20)
    except Exception:   # info unavailable -> conservative default that fits every gen
        budget = 8 << 20
    if B * bytes_per_batch <= budget:
        return B
    cands = [d for d in range(1, B) if B % d == 0
             and (d * Lp) % 128 == 0 and d * bytes_per_batch <= budget]
    if cands:
        return max(cands)
    # TODO(synk): for very long sequences with no valid batch split, additionally tile L
    # with a K-1 halo instead of falling back to a single full-extent block.
    return B


def depthwise_separable_conv1d(x, w_dw, b_dw, w_pw, b_pw, *, padding=True):
    """x: (B, C_in, L); w_dw: (C_in, 1, K); b_dw: (C_in,);
    w_pw: (C_out, C_in, 1); b_pw: (C_out,). Returns (B, C_out, L_out)."""
    B, C_in, L = x.shape
    K = w_dw.shape[-1]
    C_out = w_pw.shape[0]
    P = (K // 2) if padding else 0
    Lp = L + 2 * P
    L_out = Lp - K + 1

    # --- parameter preprocessing (tiny; no pass over x) -------------------------------
    wdw2 = w_dw[:, 0, :].astype(jnp.float32)                       # (C_in, K)
    wpw2 = w_pw[:, :, 0].astype(jnp.float32)                       # (C_out, C_in)
    b_comb = (wpw2 @ b_dw.astype(jnp.float32)
              + b_pw.astype(jnp.float32)).reshape(C_out, 1)        # fold depthwise bias

    # --- layout plumbing: channel-major, per-sequence zero pad, batch folded on lanes --
    xp = jnp.pad(x, ((0, 0), (0, 0), (P, P))) if P > 0 else x      # (B, C_in, Lp)
    xpf = jnp.transpose(xp, (1, 0, 2)).reshape(C_in, B * Lp)       # (C_in, B*Lp)

    Bt = _choose_batch_tile(B, Lp, C_in, C_out, x.dtype.itemsize)
    G = B // Bt
    Wb = Bt * Lp

    out2 = pl.pallas_call(
        dwsep_conv1d_kernel,
        out_shape=jax.ShapeDtypeStruct((C_out, B * Lp), x.dtype),
        grid_spec=pltpu.PrefetchScalarGridSpec(
            num_scalar_prefetch=0,
            grid=(G,),
            in_specs=[
                pl.BlockSpec((C_in, Wb), lambda i: (0, i)),
                pl.BlockSpec((C_in, K), lambda i: (0, 0)),       # resident
                pl.BlockSpec((C_out, C_in), lambda i: (0, 0)),   # resident
                pl.BlockSpec((C_out, 1), lambda i: (0, 0)),      # resident
            ],
            out_specs=pl.BlockSpec((C_out, Wb), lambda i: (0, i)),
        ),
        compiler_params=pltpu.CompilerParams(
            dimension_semantics=("parallel",),      # safe: every grid step is stateless
            vmem_limit_bytes=32 * 1024 * 1024,
        ),
    )(xpf, wdw2, wpw2, b_comb)

    # Discard per-sequence pad / junk columns, back to (B, C_out, L_out).
    out3 = out2.reshape(C_out, B, Lp)[:, :, :L_out]
    return jnp.transpose(out3, (1, 0, 2))


def _reference(x, w_dw, b_dw, w_pw, b_pw, padding=True):
    """Pure-JAX reference using lax.conv_general_dilated (matches F.conv1d)."""
    K = w_dw.shape[-1]
    P = (K // 2) if padding else 0
    C_in = x.shape[1]
    dn = lax.conv_dimension_numbers(x.shape, w_dw.shape, ("NCH", "OIH", "NCH"))
    y = lax.conv_general_dilated(x, w_dw, (1,), [(P, P)],
                                 dimension_numbers=dn, feature_group_count=C_in)
    y = y + b_dw[None, :, None]
    dn2 = lax.conv_dimension_numbers(y.shape, w_pw.shape, ("NCH", "OIH", "NCH"))
    z = lax.conv_general_dilated(y, w_pw, (1,), [(0, 0)], dimension_numbers=dn2)
    return z + b_pw[None, :, None]


if __name__ == "__main__":
    # Module config: num_input_channels=4, num_of_filters=8, kernel_size=5, padding=True.
    B, C_in, C_out, K, L = 2, 4, 8, 5, 16

    key = jax.random.PRNGKey(0)
    kx, k1, k2, k3, k4 = jax.random.split(key, 5)

    x = jax.random.normal(kx, (B, C_in, L), dtype=jnp.float32)

    # Deterministic parameter init mimicking PyTorch Conv1d default (uniform +-1/sqrt(fan_in)).
    bound_dw = 1.0 / jnp.sqrt(jnp.float32(1 * K))      # depthwise: in_ch/groups=1, kernel=K
    bound_pw = 1.0 / jnp.sqrt(jnp.float32(C_in * 1))   # pointwise: in_ch=C_in, kernel=1
    w_dw = jax.random.uniform(k1, (C_in, 1, K), jnp.float32, -bound_dw, bound_dw)
    b_dw = jax.random.uniform(k2, (C_in,), jnp.float32, -bound_dw, bound_dw)
    w_pw = jax.random.uniform(k3, (C_out, C_in, 1), jnp.float32, -bound_pw, bound_pw)
    b_pw = jax.random.uniform(k4, (C_out,), jnp.float32, -bound_pw, bound_pw)

    out = depthwise_separable_conv1d(x, w_dw, b_dw, w_pw, b_pw, padding=True)
    out = jax.block_until_ready(out)

    ref = jax.block_until_ready(_reference(x, w_dw, b_dw, w_pw, b_pw, padding=True))
    assert out.shape == (B, C_out, L), out.shape
    assert jnp.allclose(out, ref, atol=1e-5, rtol=1e-5), "mismatch vs lax.conv reference"

    print("KERNEL_OK")
</pallas_src>

<mosaic_0001>
module attributes {stable_mosaic.version = 11 : i64} {
  func.func @dwsep_conv1d_kernel(%arg0: i32, %arg1: memref<4x40xf32, #tpu.memory_space<vmem>>, %arg2: memref<4x5xf32, #tpu.memory_space<vmem>>, %arg3: memref<8x4xf32, #tpu.memory_space<vmem>>, %arg4: memref<8x1xf32, #tpu.memory_space<vmem>>, %arg5: memref<8x40xf32, #tpu.memory_space<vmem>>) attributes {dimension_semantics = [#tpu.dimension_semantics<parallel>], iteration_bounds = array<i64: 1>, scalar_prefetch = 0 : i64, scratch_operands = 0 : i64, tpu.core_type = #tpu.core_type<tc>, window_params = [{transform_indices = @transform_0, window_bounds = array<i64: 4, 40>}, {pipeline_mode = #tpu.pipeline_mode<synchronous>, transform_indices = @transform_1, window_bounds = array<i64: 4, 5>}, {pipeline_mode = #tpu.pipeline_mode<synchronous>, transform_indices = @transform_2, window_bounds = array<i64: 8, 4>}, {pipeline_mode = #tpu.pipeline_mode<synchronous>, transform_indices = @transform_3, window_bounds = array<i64: 8, 1>}, {transform_indices = @transform_4, window_bounds = array<i64: 8, 40>}]} {
    %c0 = arith.constant 0 : index
    %c0_0 = arith.constant 0 : index
    %0 = vector.load %arg1[%c0, %c0_0] : memref<4x40xf32, #tpu.memory_space<vmem>>, vector<4x36xf32>
    %c0_1 = arith.constant 0 : index
    %c0_2 = arith.constant 0 : index
    %1 = vector.load %arg2[%c0_1, %c0_2] : memref<4x5xf32, #tpu.memory_space<vmem>>, vector<4x1xf32>
    %2 = vector.broadcast %1 : vector<4x1xf32> to vector<4x36xf32>
    %3 = arith.mulf %0, %2 : vector<4x36xf32>
    %c0_3 = arith.constant 0 : index
    %c1 = arith.constant 1 : index
    %4 = vector.load %arg1[%c0_3, %c1] : memref<4x40xf32, #tpu.memory_space<vmem>>, vector<4x36xf32>
    %c0_4 = arith.constant 0 : index
    %c1_5 = arith.constant 1 : index
    %5 = vector.load %arg2[%c0_4, %c1_5] : memref<4x5xf32, #tpu.memory_space<vmem>>, vector<4x1xf32>
    %6 = vector.broadcast %5 : vector<4x1xf32> to vector<4x36xf32>
    %7 = arith.mulf %4, %6 : vector<4x36xf32>
    %8 = arith.addf %3, %7 : vector<4x36xf32>
    %c0_6 = arith.constant 0 : index
    %c2 = arith.constant 2 : index
    %9 = vector.load %arg1[%c0_6, %c2] : memref<4x40xf32, #tpu.memory_space<vmem>>, vector<4x36xf32>
    %c0_7 = arith.constant 0 : index
    %c2_8 = arith.constant 2 : index
    %10 = vector.load %arg2[%c0_7, %c2_8] : memref<4x5xf32, #tpu.memory_space<vmem>>, vector<4x1xf32>
    %11 = vector.broadcast %10 : vector<4x1xf32> to vector<4x36xf32>
    %12 = arith.mulf %9, %11 : vector<4x36xf32>
    %13 = arith.addf %8, %12 : vector<4x36xf32>
    %c0_9 = arith.constant 0 : index
    %c3 = arith.constant 3 : index
    %14 = vector.load %arg1[%c0_9, %c3] : memref<4x40xf32, #tpu.memory_space<vmem>>, vector<4x36xf32>
    %c0_10 = arith.constant 0 : index
    %c3_11 = arith.constant 3 : index
    %15 = vector.load %arg2[%c0_10, %c3_11] : memref<4x5xf32, #tpu.memory_space<vmem>>, vector<4x1xf32>
    %16 = vector.broadcast %15 : vector<4x1xf32> to vector<4x36xf32>
    %17 = arith.mulf %14, %16 : vector<4x36xf32>
    %18 = arith.addf %13, %17 : vector<4x36xf32>
    %c0_12 = arith.constant 0 : index
    %c4 = arith.constant 4 : index
    %19 = vector.load %arg1[%c0_12, %c4] : memref<4x40xf32, #tpu.memory_space<vmem>>, vector<4x36xf32>
    %c0_13 = arith.constant 0 : index
    %c4_14 = arith.constant 4 : index
    %20 = vector.load %arg2[%c0_13, %c4_14] : memref<4x5xf32, #tpu.memory_space<vmem>>, vector<4x1xf32>
    %21 = vector.broadcast %20 : vector<4x1xf32> to vector<4x36xf32>
    %22 = arith.mulf %19, %21 : vector<4x36xf32>
    %23 = arith.addf %18, %22 : vector<4x36xf32>
    %c0_15 = arith.constant 0 : index
    %c0_16 = arith.constant 0 : index
    %24 = vector.load %arg3[%c0_15, %c0_16] : memref<8x4xf32, #tpu.memory_space<vmem>>, vector<8x4xf32>
    %cst = arith.constant dense<0.000000e+00> : vector<8x36xf32>
    %25 = tpu.matmul %24, %23, %cst {dimension_numbers = #tpu.dot_dimension_numbers<[1], [0], [0], [1], [0, 0, 1, 1], [], []>} : vector<8x4xf32>, vector<4x36xf32>, vector<8x36xf32> -> vector<8x36xf32>
    %c0_17 = arith.constant 0 : index
    %c0_18 = arith.constant 0 : index
    %26 = vector.load %arg4[%c0_17, %c0_18] : memref<8x1xf32, #tpu.memory_space<vmem>>, vector<8x1xf32>
    %27 = vector.broadcast %26 : vector<8x1xf32> to vector<8x36xf32>
    %28 = arith.addf %25, %27 : vector<8x36xf32>
    %c0_19 = arith.constant 0 : index
    %c0_20 = arith.constant 0 : index
    %29 = vector.load %arg5[%c0_19, %c0_20] : memref<8x40xf32, #tpu.memory_space<vmem>>, vector<8x36xf32>
    tpu.vector_store %arg5[%c0_19, %c0_20], %28 {strides = array<i32>} : memref<8x40xf32, #tpu.memory_space<vmem>>, vector<8x36xf32>,
    return
  }
  func.func @transform_0(%arg0: i32) -> (i32, i32) {
    %c0_i32 = arith.constant 0 : i32
    %c0_i32_0 = arith.constant 0 : i32
    return %c0_i32, %arg0 : i32, i32
  }
  func.func @transform_1(%arg0: i32) -> (i32, i32) {
    %c0_i32 = arith.constant 0 : i32
    %c0_i32_0 = arith.constant 0 : i32
    %c0_i32_1 = arith.constant 0 : i32
    return %c0_i32, %c0_i32_0 : i32, i32
  }
  func.func @transform_2(%arg0: i32) -> (i32, i32) {
    %c0_i32 = arith.constant 0 : i32
    %c0_i32_0 = arith.constant 0 : i32
    %c0_i32_1 = arith.constant 0 : i32
    return %c0_i32, %c0_i32_0 : i32, i32
  }
  func.func @transform_3(%arg0: i32) -> (i32, i32) {
    %c0_i32 = arith.constant 0 : i32
    %c0_i32_0 = arith.constant 0 : i32
    %c0_i32_1 = arith.constant 0 : i32
    return %c0_i32, %c0_i32_0 : i32, i32
  }
  func.func @transform_4(%arg0: i32) -> (i32, i32) {
    %c0_i32 = arith.constant 0 : i32
    %c0_i32_0 = arith.constant 0 : i32
    return %c0_i32, %arg0 : i32, i32
  }
}

</mosaic_0001>

<llo_original>
// kernel: tpu_custom_call.1
$region0: #{tpu_custom_call.1}
  #allocation0 [shape = 'u32[]', space=smem, size = 0x4, offset = 0x4, fixed_abs, tag = 'smem constant byte address 0x4 - core index']
  #allocation1 [shape = 'u32[144,128]{1,0:T(1,128)}', space=vmem, size = 0x12000, scoped, tag = 'internal scratch']
  %s0 = inlined_call_operand.vmem [shape: f32[4,40], index: 0, kind: input, shape index: {}]
  %s1 = inlined_call_operand.vmem [shape: f32[4,5], index: 1, kind: input, shape index: {}]
  %s2 = inlined_call_operand.vmem [shape: f32[8,4], index: 2, kind: input, shape index: {}]
  %s3 = inlined_call_operand.vmem [shape: f32[8,1], index: 3, kind: input, shape index: {}]
  %s4 = inlined_call_operand.hbm [shape: f32[8,40], index: 4, kind: output, shape index: {}]
  %s5 = sld [smem:[#allocation0]]
  $region26: #{tpu_custom_call.1} parent=0
    _
  %s7 = ssub.s32 1, %s5
  %s8 = scalar_select 0, %s7, %s5
  $region1: #{tpu_custom_call.1} parent=0
    #allocation2 [shape = 'u8[4096]{0}', space=vmem, size = 0x1000, scoped, tag = 'output window, operand 0, single buffered']
    #allocation3 [shape = 's32[1]{0}', space=sflag, size = 0x4, scoped, tag = 'scoped memory for tpu_custom_call.1']
    %9 = vsyncpa [#allocation3], 0
    // Predicated region
    $region2: #{tpu_custom_call.1} parent=1 // pred_check
      _
    $region3: #{tpu_custom_call.1} parent=1 // pred_check_branch
      %11 = sbr.rel (0) target = $region5
    $region4: #{tpu_custom_call.1} parent=1 // pred_region
      _
    $region5: #{tpu_custom_call.1} parent=1 // pred_fallthru
      _
    // Predicated region
    $region6: #{tpu_custom_call.1} parent=1 // pred_check
      _
    $region7: #{tpu_custom_call.1} parent=1 // pred_check_branch
      %13 = sbr.rel (0) target = $region9
    $region8: #{tpu_custom_call.1} parent=1 // pred_region
      _
    $region9: #{tpu_custom_call.1} parent=1 // pred_fallthru
      _
    // Predicated region
    $region10: #{tpu_custom_call.1} parent=1 // pred_check
      _
    $region11: #{tpu_custom_call.1} parent=1 // pred_check_branch
      %15 = sbr.rel (0) target = $region13
    $region12: #{tpu_custom_call.1} parent=1 // pred_region
      _
    $region13: #{tpu_custom_call.1} parent=1 // pred_fallthru
      _
    // Predicated region
    $region14: #{tpu_custom_call.1} parent=1 // pred_check
      _
    $region15: #{tpu_custom_call.1} parent=1 // pred_check_branch
      %17 = sbr.rel (0) target = $region17
    $region16: #{tpu_custom_call.1} parent=1 // pred_region
      _
    $region17: #{tpu_custom_call.1} parent=1 // pred_fallthru
      _
    %v18 = vld [vmem:[%s0] sm:$0xf]
    %v19 = vld [vmem:[%s1] sm:$0xf]
    %21 = vset.pattern.permute.xlu0 0
    %22 = vperm.xlu0 %21, %v19
    %v23 = vpop.permute.xlu0 %22
    %v25 = vmul.f32 %v18, %v23
    %26 = vset.pattern.permute.xlu0 1
    %27 = vperm.xlu0 %26, %v19
    %v28 = vpop.permute.xlu0 %27
    %v30 = vmul.f32 %v18, %v28
    %32 = vrot.lane.b32.xlu0 %v30, 127
    %v33 = vpop.permute.xlu0 %32
    %v35 = vadd.f32 %v25, %v33
    %36 = vset.pattern.permute.xlu0 2
    %37 = vperm.xlu0 %36, %v19
    %v38 = vpop.permute.xlu0 %37
    %v40 = vmul.f32 %v18, %v38
    %42 = vrot.lane.b32.xlu0 %v40, 126
    %v43 = vpop.permute.xlu0 %42
    %v45 = vadd.f32 %v35, %v43
    %46 = vset.pattern.permute.xlu0 3
    %47 = vperm.xlu0 %46, %v19
    %v48 = vpop.permute.xlu0 %47
    %v50 = vmul.f32 %v18, %v48
    %52 = vrot.lane.b32.xlu0 %v50, 125
    %v53 = vpop.permute.xlu0 %52
    %v55 = vadd.f32 %v45, %v53
    %56 = vset.pattern.permute.xlu0 4
    %57 = vperm.xlu0 %56, %v19
    %v58 = vpop.permute.xlu0 %57
    %v60 = vmul.f32 %v18, %v58
    %62 = vrot.lane.b32.xlu0 %v60, 124
    %v63 = vpop.permute.xlu0 %62
    %v65 = vadd.f32 %v55, %v63
    %v66 = vld [vmem:[%s2] sm:$0xff]
    %v67 = vld [vmem:[%s3] sm:$0xff]
    %69 = vset.pattern.permute.xlu0 0
    %70 = vperm.xlu0 %69, %v67
    %v71 = vpop.permute.xlu0 %70
    %vm73 = vcmask 31744
    %v75 = vsel %vm73, %v66, 0
    %vm77 = vcmask 1043456
    %v79 = vsel %vm77, %v65, 0
    %81 = vmatprep.subr.mxu0 0.0
    %82 = vmatpush1.msra.mxu0 %v79
    %83 = vmatprep.subr.mxu0 0.0
    %84 = vmatpush1.msra.mxu0 0.0
    %85 = vmatprep.subr.mxu0 0.0
    %86 = vmatpush1.msra.mxu0 0.0
    %87 = vmatprep.subr.mxu0 0.0
    %88 = vmatpush1.msra.mxu0 0.0
    %89 = vmatprep.subr.mxu0 0.0
    %90 = vmatpush1.msra.mxu0 0.0
    %91 = vmatprep.subr.mxu0 0.0
    %92 = vmatpush1.msra.mxu0 0.0
    %93 = vmatprep.subr.mxu0 0.0
    %94 = vmatpush1.msra.mxu0 0.0
    %95 = vmatprep.subr.mxu0 0.0
    %96 = vmatpush1.msra.mxu0 0.0
    %97 = vmatprep.subr.mxu0 0.0
    %98 = vmatpush1.msra.mxu0 0.0
    %99 = vmatprep.subr.mxu0 0.0
    %100 = vmatpush1.msra.mxu0 0.0
    %101 = vmatprep.subr.mxu0 0.0
    %102 = vmatpush1.msra.mxu0 0.0
    %103 = vmatprep.subr.mxu0 0.0
    %104 = vmatpush1.msra.mxu0 0.0
    %105 = vmatprep.subr.mxu0 0.0
    %106 = vmatpush1.msra.mxu0 0.0
    %107 = vmatprep.subr.mxu0 0.0
    %108 = vmatpush1.msra.mxu0 0.0
    %109 = vmatprep.subr.mxu0 0.0
    %110 = vmatpush1.msra.mxu0 0.0
    %111 = vmatprep.subr.mxu0 0.0
    %112 = vmatpush1.msra.mxu0 0.0
    %113 = vmatprep.subr.mxu0 0.0
    %114 = vmatpush1.msra.mxu0 0.0
    %115 = vmatprep.subr.mxu0 0.0
    %116 = vmatpush1.msra.mxu0 0.0
    %117 = vmatprep.subr.mxu0 0.0
    %118 = vmatpush1.msra.mxu0 0.0
    %119 = vmatprep.subr.mxu0 0.0
    %120 = vmatpush1.msra.mxu0 0.0
    %121 = vmatprep.subr.mxu0 0.0
    %122 = vmatpush1.msra.mxu0 0.0
    %123 = vmatprep.subr.mxu0 0.0
    %124 = vmatpush1.msra.mxu0 0.0
    %125 = vmatprep.subr.mxu0 0.0
    %126 = vmatpush1.msra.mxu0 0.0
    %127 = vmatprep.subr.mxu0 0.0
    %128 = vmatpush1.msra.mxu0 0.0
    %129 = vmatprep.subr.mxu0 0.0
    %130 = vmatpush1.msra.mxu0 0.0
    %131 = vmatprep.subr.mxu0 0.0
    %132 = vmatpush1.msra.mxu0 0.0
    %133 = vmatprep.subr.mxu0 0.0
    %134 = vmatpush1.msra.mxu0 0.0
    %135 = vmatprep.subr.mxu0 0.0
    %136 = vmatpush1.msra.mxu0 0.0
    %137 = vmatprep.subr.mxu0 0.0
    %138 = vmatpush1.msra.mxu0 0.0
    %139 = vmatprep.subr.mxu0 0.0
    %140 = vmatpush1.msra.mxu0 0.0
    %141 = vmatprep.subr.mxu0 0.0
    %142 = vmatpush1.msra.mxu0 0.0
    %143 = vmatprep.subr.mxu0 0.0
    %144 = vmatpush1.msra.mxu0 0.0
    %145 = vmatprep.mubr.f32.mxu0 0.0
    %146 = vmatmul.mubr.f32.gmra.mrb[0].mxu0 %v75
    %v147 = vpop.f32.mrb[0].mxu0
    %v148 = vadd.f32 %v71, %v147
    %v149 = vpop.f32.mrb[0].mxu0
    %150 = vdwg.mxu0
    %vm151 = vcmask 293888
    %152 = vst.msk [vmem:[#allocation2] sm:$0xff] %vm151, %v148
    // Predicated region
    $region18: #{tpu_custom_call.1} parent=1 // pred_check
      _
    $region19: #{tpu_custom_call.1} parent=1 // pred_check_branch
      %154 = sbr.rel (0) target = $region21
    $region20: #{tpu_custom_call.1} parent=1 // pred_region
      %s156 = ssub.s32 128, 128
      %157 = vsyncadd [#allocation3], %s156
      %s159 = sshll.u32 [#allocation2], 4
      %s160 = int_to_ptr.vmem [resolvable:$true] %s159
      %162 = dma.vmem_to_hbm [thread:$0]  %s160, 128, %s4, [#allocation3]
    $region21: #{tpu_custom_call.1} parent=1 // pred_fallthru
      _
    // Predicated region
    $region22: #{tpu_custom_call.1} parent=1 // pred_check
      _
    $region23: #{tpu_custom_call.1} parent=1 // pred_check_branch
      %164 = sbr.rel (0) target = $region25
    $region24: #{tpu_custom_call.1} parent=1 // pred_region
      %165 = dma.done [#allocation3], 128
    $region25: #{tpu_custom_call.1} parent=1 // pred_fallthru
      _
    %166 = vsyncpa [#allocation3], 1

</llo_original>
